<compile_context>
chip_gen: v6e
topology: v6e:2x2x1
jax: 0.10.0
libtpu: 0.0.40
codegen_flags: <defaults>
</compile_context>

<pallas_src>
import functools

import jax
import jax.numpy as jnp
from jax.experimental import pallas as pl
from jax.experimental.pallas import tpu as pltpu


def _round_up(n, m):
    return ((n + m - 1) // m) * m


def actor_kernel(x_ref, w1_ref, b1_ref, w2_ref, b2_ref, w3_ref, b3_ref, o_ref,
                 *, n_actions):
    """Fused fc1+relu -> fc2+relu -> fc3 -> softmax on one (TB, *) batch tile."""
    cdt = w1_ref.dtype            # MXU operand dtype (f32 or bf16)
    x = x_ref[...]
    if x.dtype != cdt:
        x = x.astype(cdt)

    # fc1 + relu  (f32 accumulation; cast back to compute dtype for next MXU op)
    h1 = jnp.dot(x, w1_ref[...], preferred_element_type=jnp.float32)
    h1 = jnp.maximum(h1 + b1_ref[...], 0.0).astype(cdt)

    # fc2 + relu
    h2 = jnp.dot(h1, w2_ref[...], preferred_element_type=jnp.float32)
    h2 = jnp.maximum(h2 + b2_ref[...], 0.0).astype(cdt)

    # fc3
    logits = jnp.dot(h2, w3_ref[...], preferred_element_type=jnp.float32)
    logits = logits + b3_ref[...]

    # Numerically stable softmax over the real action lanes only.
    col = jax.lax.broadcasted_iota(jnp.int32, logits.shape, 1)
    valid = col < n_actions
    neg_big = jnp.float32(jnp.finfo(jnp.float32).min)
    logits = jnp.where(valid, logits, neg_big)
    m = jnp.max(logits, axis=-1, keepdims=True)
    e = jnp.where(valid, jnp.exp(logits - m), 0.0)
    s = jnp.sum(e, axis=-1, keepdims=True)
    # Exact divide: rows sum to 1 to f32 rounding (pl.reciprocal(approx=True)
    # is only ~1e-3 accurate under the non-Mosaic lowering).
    o_ref[...] = (e / s).astype(o_ref.dtype)


def prepare_actor_params(params, compute_dtype=jnp.bfloat16):
    """One-time prep: lane-pad hidden/action dims to 128, cast weights.

    Runs eagerly at init (NOT inside the jitted forward), so the per-call
    graph only contains the x pad and the kernel.  The state dim S is left
    unpadded (it is the full-array last dim of x / first dim of w1).
    """
    w1, b1, w2, b2, w3, b3 = params
    S, H = w1.shape
    A = w3.shape[1]
    H_pad, A_pad = _round_up(H, 128), _round_up(A, 128)
    # NOTE: on v6e/v7x (256x256 MXU) padding H to multiples of 256 when H > 128
    # fills the systolic array better; 128 is kept for v5e compatibility.

    def pad2(a, rows, cols):
        a = a.reshape(1, -1) if a.ndim == 1 else a
        return jnp.pad(a, ((0, rows - a.shape[0]), (0, cols - a.shape[1])))

    w1p = pad2(w1, S, H_pad).astype(compute_dtype)
    w2p = pad2(w2, H_pad, H_pad).astype(compute_dtype)
    w3p = pad2(w3, H_pad, A_pad).astype(compute_dtype)
    b1p = pad2(b1, 1, H_pad).astype(jnp.float32)   # bias/ReLU/softmax stay f32
    b2p = pad2(b2, 1, H_pad).astype(jnp.float32)
    b3p = pad2(b3, 1, A_pad).astype(jnp.float32)
    return (w1p, b1p, w2p, b2p, w3p, b3p)


@functools.partial(jax.jit,
                   static_argnames=("n_actions", "block_b", "out_dtype"))
def actor_forward(x, padded_params, *, n_actions, block_b=1024,
                  out_dtype=jnp.float32):
    """softmax(fc3(relu(fc2(relu(fc1(x)))))), batched over rows of x."""
    w1p, b1p, w2p, b2p, w3p, b3p = padded_params
    cdt = w1p.dtype
    B, S = x.shape
    H_pad = w1p.shape[1]
    A_pad = w3p.shape[1]

    # --- batch tiling -------------------------------------------------------
    # Pad B only to a multiple of 8 (sublane), then split into tiles so that
    #  * the grid has >= 2 steps whenever B permits (both v7x TensorCores work)
    #  * padding waste is < 8 rows per block (not a full 512-row tile).
    B_pad8 = _round_up(B, 8)
    n_blocks = max(1, pl.cdiv(B_pad8, block_b))
    if n_blocks == 1 and B_pad8 >= 16:
        n_blocks = 2
    TB = _round_up(pl.cdiv(B_pad8, n_blocks), 8)
    B_pad = TB * n_blocks

    # Stream x in the compute dtype (bf16 halves the dominant input DMA).
    xp = x.astype(cdt)
    if B_pad != B:
        xp = jnp.pad(xp, ((0, B_pad - B), (0, 0)))

    const = lambda arr: pl.BlockSpec(arr.shape, lambda i: (0, 0))  # VMEM-resident

    # VMEM budget: double-buffered x/out tiles + resident (double-buffered)
    # weights + f32 intermediates; capped at v7x's 64 MiB physical VMEM.
    w_itemsize = jnp.dtype(cdt).itemsize
    vmem_est = (2 * TB * (S * w_itemsize + A_pad * jnp.dtype(out_dtype).itemsize)
                + 2 * (w1p.size + w2p.size + w3p.size) * w_itemsize
                + 2 * (b1p.size + b2p.size + b3p.size) * 4
                + 4 * TB * H_pad * 4
                + (4 << 20))
    vmem_limit = int(min(max(vmem_est, 16 << 20), 64 << 20))

    out = pl.pallas_call(
        functools.partial(actor_kernel, n_actions=n_actions),
        out_shape=jax.ShapeDtypeStruct((B_pad, A_pad), out_dtype),
        grid=(n_blocks,),
        in_specs=[
            pl.BlockSpec((TB, S), lambda i: (i, 0)),   # streamed batch tile
            const(w1p), const(b1p),
            const(w2p), const(b2p),
            const(w3p), const(b3p),
        ],
        out_specs=pl.BlockSpec((TB, A_pad), lambda i: (i, 0)),  # lane-dense store
        compiler_params=pltpu.CompilerParams(
            dimension_semantics=("parallel",),         # shard batch over TCs
            vmem_limit_bytes=vmem_limit),
    )(xp, w1p, b1p, w2p, b2p, w3p, b3p)

    # TODO(synk): downstream consumers could take the padded (B_pad, A_pad)
    # layout directly and skip this slice copy.
    return out[:B, :n_actions]


def init_actor_params(key, n_states, n_actions, n_hiddens):
    # Mimics nn.Linear's U(-1/sqrt(fan_in), 1/sqrt(fan_in)) init.
    # Weights stored transposed relative to PyTorch: (in_features, out_features).
    def linear(key, fan_in, fan_out):
        kw, kb = jax.random.split(key)
        bound = 1.0 / jnp.sqrt(jnp.float32(fan_in))
        w = jax.random.uniform(kw, (fan_in, fan_out), jnp.float32, -bound, bound)
        b = jax.random.uniform(kb, (1, fan_out), jnp.float32, -bound, bound)
        return w, b

    k1, k2, k3 = jax.random.split(key, 3)
    w1, b1 = linear(k1, n_states, n_hiddens)
    w2, b2 = linear(k2, n_hiddens, n_hiddens)
    w3, b3 = linear(k3, n_hiddens, n_actions)
    return w1, b1, w2, b2, w3, b3


def actor_reference(x, params):
    # Pure-JAX reference (exact PyTorch forward semantics).
    w1, b1, w2, b2, w3, b3 = params
    h1 = jax.nn.relu(x @ w1 + b1)
    h2 = jax.nn.relu(h1 @ w2 + b2)
    logits = h2 @ w3 + b3
    return jax.nn.softmax(logits, axis=1)


if __name__ == "__main__":
    B, n_states, n_hiddens, n_actions = 2, 4, 32, 8

    key = jax.random.PRNGKey(0)
    kx, kp = jax.random.split(key)
    x = jax.random.normal(kx, (B, n_states), jnp.float32)
    params = init_actor_params(kp, n_states, n_actions, n_hiddens)

    ref = actor_reference(x, params)

    # f32 MXU-operand path (matches the reference closely).
    pp_f32 = prepare_actor_params(params, compute_dtype=jnp.float32)
    probs = jax.block_until_ready(
        actor_forward(x, pp_f32, n_actions=n_actions))
    assert probs.shape == (B, n_actions)
    assert jnp.allclose(jnp.sum(probs, axis=1), 1.0, atol=1e-3)
    assert jnp.allclose(probs, ref, atol=5e-3, rtol=5e-3)

    # bf16 MXU-operand path (f32 accumulation) — default for v6e/v7x.
    pp_bf16 = prepare_actor_params(params, compute_dtype=jnp.bfloat16)
    probs_bf16 = jax.block_until_ready(
        actor_forward(x, pp_bf16, n_actions=n_actions))
    assert probs_bf16.shape == (B, n_actions)
    assert jnp.allclose(jnp.sum(probs_bf16, axis=1), 1.0, atol=1e-3)
    assert jnp.allclose(probs_bf16, ref, atol=3e-2, rtol=3e-2)

    print("KERNEL_OK")
</pallas_src>

<mosaic_0001>
module attributes {stable_mosaic.version = 11 : i64} {
  func.func @actor_kernel(%arg0: i32, %arg1: memref<8x4xf32, #tpu.memory_space<vmem>>, %arg2: memref<4x128xf32, #tpu.memory_space<vmem>>, %arg3: memref<1x128xf32, #tpu.memory_space<vmem>>, %arg4: memref<128x128xf32, #tpu.memory_space<vmem>>, %arg5: memref<1x128xf32, #tpu.memory_space<vmem>>, %arg6: memref<128x128xf32, #tpu.memory_space<vmem>>, %arg7: memref<1x128xf32, #tpu.memory_space<vmem>>, %arg8: memref<8x128xf32, #tpu.memory_space<vmem>>) attributes {dimension_semantics = [#tpu.dimension_semantics<parallel>], iteration_bounds = array<i64: 1>, scalar_prefetch = 0 : i64, scratch_operands = 0 : i64, tpu.core_type = #tpu.core_type<tc>, window_params = [{transform_indices = @transform_0, window_bounds = array<i64: 8, 4>}, {pipeline_mode = #tpu.pipeline_mode<synchronous>, transform_indices = @transform_1, window_bounds = array<i64: 4, 128>}, {pipeline_mode = #tpu.pipeline_mode<synchronous>, transform_indices = @transform_2, window_bounds = array<i64: 1, 128>}, {pipeline_mode = #tpu.pipeline_mode<synchronous>, transform_indices = @transform_3, window_bounds = array<i64: 128, 128>}, {pipeline_mode = #tpu.pipeline_mode<synchronous>, transform_indices = @transform_4, window_bounds = array<i64: 1, 128>}, {pipeline_mode = #tpu.pipeline_mode<synchronous>, transform_indices = @transform_5, window_bounds = array<i64: 128, 128>}, {pipeline_mode = #tpu.pipeline_mode<synchronous>, transform_indices = @transform_6, window_bounds = array<i64: 1, 128>}, {transform_indices = @transform_7, window_bounds = array<i64: 8, 128>}]} {
    %c0 = arith.constant 0 : index
    %c0_0 = arith.constant 0 : index
    %0 = vector.load %arg1[%c0, %c0_0] : memref<8x4xf32, #tpu.memory_space<vmem>>, vector<8x4xf32>
    %c0_1 = arith.constant 0 : index
    %c0_2 = arith.constant 0 : index
    %1 = vector.load %arg2[%c0_1, %c0_2] : memref<4x128xf32, #tpu.memory_space<vmem>>, vector<4x128xf32>
    %cst = arith.constant dense<0.000000e+00> : vector<8x128xf32>
    %2 = tpu.matmul %0, %1, %cst {dimension_numbers = #tpu.dot_dimension_numbers<[1], [0], [0], [1], [0, 0, 1, 1], [], []>} : vector<8x4xf32>, vector<4x128xf32>, vector<8x128xf32> -> vector<8x128xf32>
    %c0_3 = arith.constant 0 : index
    %c0_4 = arith.constant 0 : index
    %3 = vector.load %arg3[%c0_3, %c0_4] : memref<1x128xf32, #tpu.memory_space<vmem>>, vector<1x128xf32>
    %4 = vector.broadcast %3 : vector<1x128xf32> to vector<8x128xf32>
    %5 = arith.addf %2, %4 : vector<8x128xf32>
    %cst_5 = arith.constant 0.000000e+00 : f32
    %6 = vector.broadcast %cst_5 : f32 to vector<8x128xf32>
    %7 = arith.maximumf %5, %6 : vector<8x128xf32>
    %c0_6 = arith.constant 0 : index
    %c0_7 = arith.constant 0 : index
    %8 = vector.load %arg4[%c0_6, %c0_7] : memref<128x128xf32, #tpu.memory_space<vmem>>, vector<128x128xf32>
    %cst_8 = arith.constant dense<0.000000e+00> : vector<8x128xf32>
    %9 = tpu.matmul %7, %8, %cst_8 {dimension_numbers = #tpu.dot_dimension_numbers<[1], [0], [0], [1], [0, 0, 1, 1], [], []>} : vector<8x128xf32>, vector<128x128xf32>, vector<8x128xf32> -> vector<8x128xf32>
    %c0_9 = arith.constant 0 : index
    %c0_10 = arith.constant 0 : index
    %10 = vector.load %arg5[%c0_9, %c0_10] : memref<1x128xf32, #tpu.memory_space<vmem>>, vector<1x128xf32>
    %11 = vector.broadcast %10 : vector<1x128xf32> to vector<8x128xf32>
    %12 = arith.addf %9, %11 : vector<8x128xf32>
    %cst_11 = arith.constant 0.000000e+00 : f32
    %13 = vector.broadcast %cst_11 : f32 to vector<8x128xf32>
    %14 = arith.maximumf %12, %13 : vector<8x128xf32>
    %c0_12 = arith.constant 0 : index
    %c0_13 = arith.constant 0 : index
    %15 = vector.load %arg6[%c0_12, %c0_13] : memref<128x128xf32, #tpu.memory_space<vmem>>, vector<128x128xf32>
    %cst_14 = arith.constant dense<0.000000e+00> : vector<8x128xf32>
    %16 = tpu.matmul %14, %15, %cst_14 {dimension_numbers = #tpu.dot_dimension_numbers<[1], [0], [0], [1], [0, 0, 1, 1], [], []>} : vector<8x128xf32>, vector<128x128xf32>, vector<8x128xf32> -> vector<8x128xf32>
    %c0_15 = arith.constant 0 : index
    %c0_16 = arith.constant 0 : index
    %17 = vector.load %arg7[%c0_15, %c0_16] : memref<1x128xf32, #tpu.memory_space<vmem>>, vector<1x128xf32>
    %18 = vector.broadcast %17 : vector<1x128xf32> to vector<8x128xf32>
    %19 = arith.addf %16, %18 : vector<8x128xf32>
    %20 = tpu.iota {dimensions = array<i32: 1>} : vector<8x128xi32>
    %c8_i32 = arith.constant 8 : i32
    %21 = vector.broadcast %c8_i32 : i32 to vector<8x128xi32>
    %22 = arith.cmpi slt, %20, %21 : vector<8x128xi32>
    %cst_17 = arith.constant -3.40282347E+38 : f32
    %23 = vector.broadcast %cst_17 : f32 to vector<8x128xf32>
    %24 = arith.select %22, %19, %23 : vector<8x128xi1>, vector<8x128xf32>
    %cst_18 = arith.constant dense<0xFF800000> : vector<8xf32>
    %25 = vector.multi_reduction <maximumf>, %24, %cst_18 [1] : vector<8x128xf32> to vector<8xf32>
    %26 = vector.shape_cast %25 : vector<8xf32> to vector<8x1xf32>
    %27 = vector.broadcast %26 : vector<8x1xf32> to vector<8x128xf32>
    %28 = arith.subf %24, %27 : vector<8x128xf32>
    %29 = math.exp %28 : vector<8x128xf32>
    %cst_19 = arith.constant 0.000000e+00 : f32
    %30 = vector.broadcast %cst_19 : f32 to vector<8x128xf32>
    %31 = arith.select %22, %29, %30 : vector<8x128xi1>, vector<8x128xf32>
    %cst_20 = arith.constant dense<0.000000e+00> : vector<8xf32>
    %32 = vector.multi_reduction <add>, %31, %cst_20 [1] : vector<8x128xf32> to vector<8xf32>
    %33 = vector.shape_cast %32 : vector<8xf32> to vector<8x1xf32>
    %34 = vector.broadcast %33 : vector<8x1xf32> to vector<8x128xf32>
    %35 = arith.divf %31, %34 : vector<8x128xf32>
    %c0_21 = arith.constant 0 : index
    %c0_22 = arith.constant 0 : index
    %36 = vector.load %arg8[%c0_21, %c0_22] : memref<8x128xf32, #tpu.memory_space<vmem>>, vector<8x128xf32>
    tpu.vector_store %arg8[%c0_21, %c0_22], %35 {strides = array<i32>} : memref<8x128xf32, #tpu.memory_space<vmem>>, vector<8x128xf32>,
    return
  }
  func.func @transform_0(%arg0: i32) -> (i32, i32) {
    %c0_i32 = arith.constant 0 : i32
    %c0_i32_0 = arith.constant 0 : i32
    return %arg0, %c0_i32 : i32, i32
  }
  func.func @transform_1(%arg0: i32) -> (i32, i32) {
    %c0_i32 = arith.constant 0 : i32
    %c0_i32_0 = arith.constant 0 : i32
    %c0_i32_1 = arith.constant 0 : i32
    return %c0_i32, %c0_i32_0 : i32, i32
  }
  func.func @transform_2(%arg0: i32) -> (i32, i32) {
    %c0_i32 = arith.constant 0 : i32
    %c0_i32_0 = arith.constant 0 : i32
    %c0_i32_1 = arith.constant 0 : i32
    return %c0_i32, %c0_i32_0 : i32, i32
  }
  func.func @transform_3(%arg0: i32) -> (i32, i32) {
    %c0_i32 = arith.constant 0 : i32
    %c0_i32_0 = arith.constant 0 : i32
    %c0_i32_1 = arith.constant 0 : i32
    return %c0_i32, %c0_i32_0 : i32, i32
  }
  func.func @transform_4(%arg0: i32) -> (i32, i32) {
    %c0_i32 = arith.constant 0 : i32
    %c0_i32_0 = arith.constant 0 : i32
    %c0_i32_1 = arith.constant 0 : i32
    return %c0_i32, %c0_i32_0 : i32, i32
  }
  func.func @transform_5(%arg0: i32) -> (i32, i32) {
    %c0_i32 = arith.constant 0 : i32
    %c0_i32_0 = arith.constant 0 : i32
    %c0_i32_1 = arith.constant 0 : i32
    return %c0_i32, %c0_i32_0 : i32, i32
  }
  func.func @transform_6(%arg0: i32) -> (i32, i32) {
    %c0_i32 = arith.constant 0 : i32
    %c0_i32_0 = arith.constant 0 : i32
    %c0_i32_1 = arith.constant 0 : i32
    return %c0_i32, %c0_i32_0 : i32, i32
  }
  func.func @transform_7(%arg0: i32) -> (i32, i32) {
    %c0_i32 = arith.constant 0 : i32
    %c0_i32_0 = arith.constant 0 : i32
    return %arg0, %c0_i32 : i32, i32
  }
}

</mosaic_0001>

<llo_original>
// kernel: actor_forward.1
$region0: #{actor_forward.1}
  #allocation0 [shape = 'u32[]', space=smem, size = 0x4, offset = 0x4, fixed_abs, tag = 'smem constant byte address 0x4 - core index']
  #allocation1 [shape = 'u32[144,128]{1,0:T(1,128)}', space=vmem, size = 0x12000, scoped, tag = 'internal scratch']
  %s0 = inlined_call_operand.vmem [shape: f32[8,4], index: 0, kind: input, shape index: {}]
  %s1 = inlined_call_operand.vmem [shape: f32[4,128], index: 1, kind: input, shape index: {}]
  %s2 = inlined_call_operand.vmem [shape: f32[1,128], index: 2, kind: input, shape index: {}]
  %s3 = inlined_call_operand.hbm [shape: f32[128,128], index: 3, kind: input, shape index: {}]
  %s4 = inlined_call_operand.vmem [shape: f32[1,128], index: 4, kind: input, shape index: {}]
  %s5 = inlined_call_operand.hbm [shape: f32[128,128], index: 5, kind: input, shape index: {}]
  %s6 = inlined_call_operand.vmem [shape: f32[1,128], index: 6, kind: input, shape index: {}]
  %s7 = inlined_call_operand.vmem [shape: f32[8,128], index: 7, kind: output, shape index: {}]
  %s8 = sld [smem:[#allocation0]]
  $region46: #{actor_forward.1} parent=0
    _
  %s10 = ssub.s32 1, %s8
  %s11 = scalar_select 0, %s10, %s8
  $region1: #{actor_forward.1} parent=0
    #allocation2 [shape = 'u8[65536]{0}', space=vmem, size = 0x10000, scoped, tag = 'input window, operand 3, single buffered']
    #allocation3 [shape = 's32[1]{0}', space=sflag, size = 0x4, scoped, tag = 'scoped memory for actor_forward.1']
    #allocation4 [shape = 'u8[65536]{0}', space=vmem, size = 0x10000, scoped, tag = 'input window, operand 5, single buffered']
    #allocation5 [shape = 's32[1]{0}', space=sflag, size = 0x4, scoped, tag = 'scoped memory for actor_forward.1']
    %12 = vsyncpa [#allocation3], 0
    %13 = vsyncpa [#allocation5], 0
    // Predicated region
    $region2: #{actor_forward.1} parent=1 // pred_check
      _
    $region3: #{actor_forward.1} parent=1 // pred_check_branch
      %15 = sbr.rel (0) target = $region5
    $region4: #{actor_forward.1} parent=1 // pred_region
      _
    $region5: #{actor_forward.1} parent=1 // pred_fallthru
      _
    // Predicated region
    $region6: #{actor_forward.1} parent=1 // pred_check
      _
    $region7: #{actor_forward.1} parent=1 // pred_check_branch
      %17 = sbr.rel (0) target = $region9
    $region8: #{actor_forward.1} parent=1 // pred_region
      _
    $region9: #{actor_forward.1} parent=1 // pred_fallthru
      _
    // Predicated region
    $region10: #{actor_forward.1} parent=1 // pred_check
      _
    $region11: #{actor_forward.1} parent=1 // pred_check_branch
      %19 = sbr.rel (0) target = $region13
    $region12: #{actor_forward.1} parent=1 // pred_region
      _
    $region13: #{actor_forward.1} parent=1 // pred_fallthru
      _
    // Predicated region
    $region14: #{actor_forward.1} parent=1 // pred_check
      _
    $region15: #{actor_forward.1} parent=1 // pred_check_branch
      %21 = sbr.rel (0) target = $region17
    $region16: #{actor_forward.1} parent=1 // pred_region
      %s23 = ssub.s32 2048, 2048
      %24 = vsyncadd [#allocation3], %s23
      %s25 = sshll.u32 [#allocation2], 4
      %s26 = int_to_ptr.vmem [resolvable:$true] %s25
      %31 = dma.hbm_to_vmem [thread:$0]  %s3, 2048, %s26, [#allocation3], 128, 128, 8
    $region17: #{actor_forward.1} parent=1 // pred_fallthru
      _
    // Predicated region
    $region18: #{actor_forward.1} parent=1 // pred_check
      _
    $region19: #{actor_forward.1} parent=1 // pred_check_branch
      %33 = sbr.rel (0) target = $region21
    $region20: #{actor_forward.1} parent=1 // pred_region
      _
    $region21: #{actor_forward.1} parent=1 // pred_fallthru
      _
    // Predicated region
    $region22: #{actor_forward.1} parent=1 // pred_check
      _
    $region23: #{actor_forward.1} parent=1 // pred_check_branch
      %35 = sbr.rel (0) target = $region25
    $region24: #{actor_forward.1} parent=1 // pred_region
      %s37 = ssub.s32 2048, 2048
      %38 = vsyncadd [#allocation5], %s37
      %s39 = sshll.u32 [#allocation4], 4
      %s40 = int_to_ptr.vmem [resolvable:$true] %s39
      %45 = dma.hbm_to_vmem [thread:$0]  %s5, 2048, %s40, [#allocation5], 128, 128, 8
    $region25: #{actor_forward.1} parent=1 // pred_fallthru
      _
    // Predicated region
    $region26: #{actor_forward.1} parent=1 // pred_check
      _
    $region27: #{actor_forward.1} parent=1 // pred_check_branch
      %47 = sbr.rel (0) target = $region29
    $region28: #{actor_forward.1} parent=1 // pred_region
      _
    $region29: #{actor_forward.1} parent=1 // pred_fallthru
      _
    // Predicated region
    $region30: #{actor_forward.1} parent=1 // pred_check
      _
    $region31: #{actor_forward.1} parent=1 // pred_check_branch
      %49 = sbr.rel (0) target = $region33
    $region32: #{actor_forward.1} parent=1 // pred_region
      %50 = dma.done [#allocation3], 2048
    $region33: #{actor_forward.1} parent=1 // pred_fallthru
      _
    // Predicated region
    $region34: #{actor_forward.1} parent=1 // pred_check
      _
    $region35: #{actor_forward.1} parent=1 // pred_check_branch
      %52 = sbr.rel (0) target = $region37
    $region36: #{actor_forward.1} parent=1 // pred_region
      %53 = dma.done [#allocation5], 2048
    $region37: #{actor_forward.1} parent=1 // pred_fallthru
      _
    %v54 = vld [vmem:[%s0] sm:$0xff]
    %v55 = vld [vmem:[%s1] sm:$0xf]
    %v56 = vld [vmem:[%s2] sm:$0x1]
    %v58 = vlaneseq
    %v59 = vshrl.u32 %v58, 7
    %v60 = vsub.s32 0, %v59
    %v61 = vrot.slane %v56, %v60
    %vm63 = vcmask 31744
    %v65 = vsel %vm63, %v54, 0
    %vm67 = vcmask 1043456
    %v69 = vsel %vm67, %v55, 0
    %71 = vmatprep.subr.mxu0 0.0
    %72 = vmatpush1.msra.mxu0 0.0
    %73 = vmatprep.subr.mxu0 0.0
    %74 = vmatpush1.msra.mxu0 0.0
    %75 = vmatprep.subr.mxu0 0.0
    %76 = vmatpush1.msra.mxu0 0.0
    %77 = vmatprep.subr.mxu0 0.0
    %78 = vmatpush1.msra.mxu0 0.0
    %79 = vmatprep.subr.mxu0 0.0
    %80 = vmatpush1.msra.mxu0 0.0
    %81 = vmatprep.subr.mxu0 0.0
    %82 = vmatpush1.msra.mxu0 0.0
    %83 = vmatprep.subr.mxu0 0.0
    %84 = vmatpush1.msra.mxu0 0.0
    %85 = vmatprep.subr.mxu0 0.0
    %86 = vmatpush1.msra.mxu0 0.0
    %87 = vmatprep.subr.mxu0 0.0
    %88 = vmatpush1.msra.mxu0 0.0
    %89 = vmatprep.subr.mxu0 0.0
    %90 = vmatpush1.msra.mxu0 0.0
    %91 = vmatprep.subr.mxu0 0.0
    %92 = vmatpush1.msra.mxu0 0.0
    %93 = vmatprep.subr.mxu0 0.0
    %94 = vmatpush1.msra.mxu0 0.0
    %95 = vmatprep.subr.mxu0 0.0
    %96 = vmatpush1.msra.mxu0 0.0
    %97 = vmatprep.subr.mxu0 0.0
    %98 = vmatpush1.msra.mxu0 0.0
    %99 = vmatprep.subr.mxu0 0.0
    %100 = vmatpush1.msra.mxu0 0.0
    %101 = vmatprep.subr.mxu0 0.0
    %102 = vmatpush1.msra.mxu0 %v69
    %103 = vmatprep.subr.mxu0 0.0
    %104 = vmatpush2.msra.mxu0 0.0
    %105 = vmatprep.subr.mxu0 0.0
    %106 = vmatpush2.msra.mxu0 0.0
    %107 = vmatprep.subr.mxu0 0.0
    %108 = vmatpush2.msra.mxu0 0.0
    %109 = vmatprep.subr.mxu0 0.0
    %110 = vmatpush2.msra.mxu0 0.0
    %111 = vmatprep.subr.mxu0 0.0
    %112 = vmatpush2.msra.mxu0 0.0
    %113 = vmatprep.subr.mxu0 0.0
    %114 = vmatpush2.msra.mxu0 0.0
    %115 = vmatprep.subr.mxu0 0.0
    %116 = vmatpush2.msra.mxu0 0.0
    %117 = vmatprep.subr.mxu0 0.0
    %118 = vmatpush2.msra.mxu0 0.0
    %119 = vmatprep.subr.mxu0 0.0
    %120 = vmatpush2.msra.mxu0 0.0
    %121 = vmatprep.subr.mxu0 0.0
    %122 = vmatpush2.msra.mxu0 0.0
    %123 = vmatprep.subr.mxu0 0.0
    %124 = vmatpush2.msra.mxu0 0.0
    %125 = vmatprep.subr.mxu0 0.0
    %126 = vmatpush2.msra.mxu0 0.0
    %127 = vmatprep.subr.mxu0 0.0
    %128 = vmatpush2.msra.mxu0 0.0
    %129 = vmatprep.subr.mxu0 0.0
    %130 = vmatpush2.msra.mxu0 0.0
    %131 = vmatprep.subr.mxu0 0.0
    %132 = vmatpush2.msra.mxu0 0.0
    %133 = vmatprep.subr.mxu0 0.0
    %134 = vmatpush2.msra.mxu0 0.0
    %135 = vmatprep.mubr.f32.mxu0 0.0
    %136 = vmatmul.mubr.f32.gmra.mxu0 %v65
    %v137 = vpop.f32.mrf.mxu0
    %v138 = vadd.f32 %v61, %v137
    %v139 = vpop.f32.mrf.mxu0
    %140 = vdwg.mxu0
    %v141 = vmax.f32 %v138, 0.0
    %v142 = vld [vmem:[#allocation2] sm:$0xff]
    %v143 = vld [vmem:[#allocation2 + $0x8] sm:$0xff]
    %v144 = vld [vmem:[#allocation2 + $0x10] sm:$0xff]
    %v145 = vld [vmem:[#allocation2 + $0x18] sm:$0xff]
    %v146 = vld [vmem:[#allocation2 + $0x20] sm:$0xff]
    %v147 = vld [vmem:[#allocation2 + $0x28] sm:$0xff]
    %v148 = vld [vmem:[#allocation2 + $0x30] sm:$0xff]
    %v149 = vld [vmem:[#allocation2 + $0x38] sm:$0xff]
    %v150 = vld [vmem:[#allocation2 + $0x40] sm:$0xff]
    %v151 = vld [vmem:[#allocation2 + $0x48] sm:$0xff]
    %v152 = vld [vmem:[#allocation2 + $0x50] sm:$0xff]
    %v153 = vld [vmem:[#allocation2 + $0x58] sm:$0xff]
    %v154 = vld [vmem:[#allocation2 + $0x60] sm:$0xff]
    %v155 = vld [vmem:[#allocation2 + $0x68] sm:$0xff]
    %v156 = vld [vmem:[#allocation2 + $0x70] sm:$0xff]
    %v157 = vld [vmem:[#allocation2 + $0x78] sm:$0xff]
    %v158 = vld [vmem:[%s4] sm:$0x1]
    %v160 = vlaneseq
    %v161 = vshrl.u32 %v160, 7
    %v162 = vsub.s32 0, %v161
    %v163 = vrot.slane %v158, %v162
    %165 = vmatprep.subr.mxu0 0.0
    %166 = vmatpush1.msra.mxu0 %v157
    %167 = vmatprep.subr.mxu0 0.0
    %168 = vmatpush1.msra.mxu0 %v156
    %169 = vmatprep.subr.mxu0 0.0
    %170 = vmatpush1.msra.mxu0 %v155
    %171 = vmatprep.subr.mxu0 0.0
    %172 = vmatpush1.msra.mxu0 %v154
    %173 = vmatprep.subr.mxu0 0.0
    %174 = vmatpush1.msra.mxu0 %v153
    %175 = vmatprep.subr.mxu0 0.0
    %176 = vmatpush1.msra.mxu0 %v152
    %177 = vmatprep.subr.mxu0 0.0
    %178 = vmatpush1.msra.mxu0 %v151
    %179 = vmatprep.subr.mxu0 0.0
    %180 = vmatpush1.msra.mxu0 %v150
    %181 = vmatprep.subr.mxu0 0.0
    %182 = vmatpush1.msra.mxu0 %v149
    %183 = vmatprep.subr.mxu0 0.0
    %184 = vmatpush1.msra.mxu0 %v148
    %185 = vmatprep.subr.mxu0 0.0
    %186 = vmatpush1.msra.mxu0 %v147
    %187 = vmatprep.subr.mxu0 0.0
    %188 = vmatpush1.msra.mxu0 %v146
    %189 = vmatprep.subr.mxu0 0.0
    %190 = vmatpush1.msra.mxu0 %v145
    %191 = vmatprep.subr.mxu0 0.0
    %192 = vmatpush1.msra.mxu0 %v144
    %193 = vmatprep.subr.mxu0 0.0
    %194 = vmatpush1.msra.mxu0 %v143
    %195 = vmatprep.subr.mxu0 0.0
    %196 = vmatpush1.msra.mxu0 %v142
    %197 = vmatprep.subr.mxu0 0.0
    %198 = vmatpush2.msra.mxu0 0.0
    %199 = vmatprep.subr.mxu0 0.0
    %200 = vmatpush2.msra.mxu0 0.0
    %201 = vmatprep.subr.mxu0 0.0
    %202 = vmatpush2.msra.mxu0 0.0
    %203 = vmatprep.subr.mxu0 0.0
    %204 = vmatpush2.msra.mxu0 0.0
    %205 = vmatprep.subr.mxu0 0.0
    %206 = vmatpush2.msra.mxu0 0.0
    %207 = vmatprep.subr.mxu0 0.0
    %208 = vmatpush2.msra.mxu0 0.0
    %209 = vmatprep.subr.mxu0 0.0
    %210 = vmatpush2.msra.mxu0 0.0
    %211 = vmatprep.subr.mxu0 0.0
    %212 = vmatpush2.msra.mxu0 0.0
    %213 = vmatprep.subr.mxu0 0.0
    %214 = vmatpush2.msra.mxu0 0.0
    %215 = vmatprep.subr.mxu0 0.0
    %216 = vmatpush2.msra.mxu0 0.0
    %217 = vmatprep.subr.mxu0 0.0
    %218 = vmatpush2.msra.mxu0 0.0
    %219 = vmatprep.subr.mxu0 0.0
    %220 = vmatpush2.msra.mxu0 0.0
    %221 = vmatprep.subr.mxu0 0.0
    %222 = vmatpush2.msra.mxu0 0.0
    %223 = vmatprep.subr.mxu0 0.0
    %224 = vmatpush2.msra.mxu0 0.0
    %225 = vmatprep.subr.mxu0 0.0
    %226 = vmatpush2.msra.mxu0 0.0
    %227 = vmatprep.subr.mxu0 0.0
    %228 = vmatpush2.msra.mxu0 0.0
    %229 = vmatprep.mubr.f32.mxu0 0.0
    %230 = vmatmul.mubr.f32.gmra.mxu0 %v141
    %v231 = vpop.f32.mrf.mxu0
    %v232 = vadd.f32 %v163, %v231
    %v233 = vpop.f32.mrf.mxu0
    %234 = vdwg.mxu0
    %v235 = vmax.f32 %v232, 0.0
    %v236 = vld [vmem:[#allocation4] sm:$0xff]
    %v237 = vld [vmem:[#allocation4 + $0x8] sm:$0xff]
    %v238 = vld [vmem:[#allocation4 + $0x10] sm:$0xff]
    %v239 = vld [vmem:[#allocation4 + $0x18] sm:$0xff]
    %v240 = vld [vmem:[#allocation4 + $0x20] sm:$0xff]
    %v241 = vld [vmem:[#allocation4 + $0x28] sm:$0xff]
    %v242 = vld [vmem:[#allocation4 + $0x30] sm:$0xff]
    %v243 = vld [vmem:[#allocation4 + $0x38] sm:$0xff]
    %v244 = vld [vmem:[#allocation4 + $0x40] sm:$0xff]
    %v245 = vld [vmem:[#allocation4 + $0x48] sm:$0xff]
    %v246 = vld [vmem:[#allocation4 + $0x50] sm:$0xff]
    %v247 = vld [vmem:[#allocation4 + $0x58] sm:$0xff]
    %v248 = vld [vmem:[#allocation4 + $0x60] sm:$0xff]
    %v249 = vld [vmem:[#allocation4 + $0x68] sm:$0xff]
    %v250 = vld [vmem:[#allocation4 + $0x70] sm:$0xff]
    %v251 = vld [vmem:[#allocation4 + $0x78] sm:$0xff]
    %v252 = vld [vmem:[%s6] sm:$0x1]
    %v254 = vlaneseq
    %v255 = vshrl.u32 %v254, 7
    %v256 = vsub.s32 0, %v255
    %v257 = vrot.slane %v252, %v256
    %259 = vmatprep.subr.mxu0 0.0
    %260 = vmatpush1.msra.mxu0 %v251
    %261 = vmatprep.subr.mxu0 0.0
    %262 = vmatpush1.msra.mxu0 %v250
    %263 = vmatprep.subr.mxu0 0.0
    %264 = vmatpush1.msra.mxu0 %v249
    %265 = vmatprep.subr.mxu0 0.0
    %266 = vmatpush1.msra.mxu0 %v248
    %267 = vmatprep.subr.mxu0 0.0
    %268 = vmatpush1.msra.mxu0 %v247
    %269 = vmatprep.subr.mxu0 0.0
    %270 = vmatpush1.msra.mxu0 %v246
    %271 = vmatprep.subr.mxu0 0.0
    %272 = vmatpush1.msra.mxu0 %v245
    %273 = vmatprep.subr.mxu0 0.0
    %274 = vmatpush1.msra.mxu0 %v244
    %275 = vmatprep.subr.mxu0 0.0
    %276 = vmatpush1.msra.mxu0 %v243
    %277 = vmatprep.subr.mxu0 0.0
    %278 = vmatpush1.msra.mxu0 %v242
    %279 = vmatprep.subr.mxu0 0.0
    %280 = vmatpush1.msra.mxu0 %v241
    %281 = vmatprep.subr.mxu0 0.0
    %282 = vmatpush1.msra.mxu0 %v240
    %283 = vmatprep.subr.mxu0 0.0
    %284 = vmatpush1.msra.mxu0 %v239
    %285 = vmatprep.subr.mxu0 0.0
    %286 = vmatpush1.msra.mxu0 %v238
    %287 = vmatprep.subr.mxu0 0.0
    %288 = vmatpush1.msra.mxu0 %v237
    %289 = vmatprep.subr.mxu0 0.0
    %290 = vmatpush1.msra.mxu0 %v236
    %291 = vmatprep.subr.mxu0 0.0
    %292 = vmatpush2.msra.mxu0 0.0
    %293 = vmatprep.subr.mxu0 0.0
    %294 = vmatpush2.msra.mxu0 0.0
    %295 = vmatprep.subr.mxu0 0.0
    %296 = vmatpush2.msra.mxu0 0.0
    %297 = vmatprep.subr.mxu0 0.0
    %298 = vmatpush2.msra.mxu0 0.0
    %299 = vmatprep.subr.mxu0 0.0
    %300 = vmatpush2.msra.mxu0 0.0
    %301 = vmatprep.subr.mxu0 0.0
    %302 = vmatpush2.msra.mxu0 0.0
    %303 = vmatprep.subr.mxu0 0.0
    %304 = vmatpush2.msra.mxu0 0.0
    %305 = vmatprep.subr.mxu0 0.0
    %306 = vmatpush2.msra.mxu0 0.0
    %307 = vmatprep.subr.mxu0 0.0
    %308 = vmatpush2.msra.mxu0 0.0
    %309 = vmatprep.subr.mxu0 0.0
    %310 = vmatpush2.msra.mxu0 0.0
    %311 = vmatprep.subr.mxu0 0.0
    %312 = vmatpush2.msra.mxu0 0.0
    %313 = vmatprep.subr.mxu0 0.0
    %314 = vmatpush2.msra.mxu0 0.0
    %315 = vmatprep.subr.mxu0 0.0
    %316 = vmatpush2.msra.mxu0 0.0
    %317 = vmatprep.subr.mxu0 0.0
    %318 = vmatpush2.msra.mxu0 0.0
    %319 = vmatprep.subr.mxu0 0.0
    %320 = vmatpush2.msra.mxu0 0.0
    %321 = vmatprep.subr.mxu0 0.0
    %322 = vmatpush2.msra.mxu0 0.0
    %323 = vmatprep.mubr.f32.mxu0 0.0
    %324 = vmatmul.mubr.f32.gmra.mxu0 %v235
    %v325 = vpop.f32.mrf.mxu0
    %v326 = vadd.f32 %v257, %v325
    %v327 = vpop.f32.mrf.mxu0
    %328 = vdwg.mxu0
    %v329 = vlaneseq
    %v330 = vand.u32 %v329, 127
    %vm331 = vcmp.lt.s32.totalorder %v330, 8
    %v332 = vsel %vm331, %v326, -3.4028235e+38
    %333 = vmax.xlane.f32.xlu0 %v332
    %v334 = vpop.xlane.xlu0 %333
    %v335 = vsub.f32 %v332, %v334
    %v336 = vmul.f32 %v335, 1.442695
    %v337 = vpow.pop %v336
    %v338 = vsel %vm331, %v337, 0.0
    %339 = vadd.xlane.f32.xlu0 %v338
    %v340 = vpop.xlane.xlu0 %339
    %v341 = vrcp.pop %v340
    %v342 = vmul.f32 %v338, %v341
    %343 = vst [vmem:[%s7] sm:$0xff] %v342
    // Predicated region
    $region38: #{actor_forward.1} parent=1 // pred_check
      _
    $region39: #{actor_forward.1} parent=1 // pred_check_branch
      %345 = sbr.rel (0) target = $region41
    $region40: #{actor_forward.1} parent=1 // pred_region
      _
    $region41: #{actor_forward.1} parent=1 // pred_fallthru
      _
    // Predicated region
    $region42: #{actor_forward.1} parent=1 // pred_check
      _
    $region43: #{actor_forward.1} parent=1 // pred_check_branch
      %347 = sbr.rel (0) target = $region45
    $region44: #{actor_forward.1} parent=1 // pred_region
      _
    $region45: #{actor_forward.1} parent=1 // pred_fallthru
      _
    %348 = vsyncpa [#allocation3], 1
    %349 = vsyncpa [#allocation5], 1

</llo_original>
